<compile_context>
chip_gen: v6e
topology: v6e:2x2x1
jax: 0.10.0
libtpu: 0.0.40
codegen_flags: <defaults>
</compile_context>

<pallas_src>
import functools

import jax
import jax.numpy as jnp
from jax.experimental import pallas as pl
from jax.experimental.pallas import tpu as pltpu

LANE = 128
_VMEM_CAP = 32 * 1024 * 1024       # safe scoped-VMEM ceiling on v5e/v6e/v7x
_VMEM_HEADROOM = 8 * 1024 * 1024


def _round_up(x, m):
    return (x + m - 1) // m * m


def _vmem_limit(footprint_bytes):
    return int(min(footprint_bytes + _VMEM_HEADROOM, _VMEM_CAP))


# ----------------------------------------------------------------------------
# Glue: dense symmetric GCN normalization (torch_geometric gcn_norm,
# add_self_loops=True), scattered directly into a padded (pad_to, pad_to) buffer.
# ----------------------------------------------------------------------------
def gcn_norm_dense(edge_index, edge_weight, num_nodes, pad_to=None):
    if pad_to is None:
        pad_to = num_nodes
    if edge_weight is None:
        edge_weight = jnp.ones((edge_index.shape[1],), jnp.float32)
    loop = jnp.arange(num_nodes, dtype=edge_index.dtype)
    row = jnp.concatenate([edge_index[0], loop])          # source nodes j
    col = jnp.concatenate([edge_index[1], loop])          # target nodes i
    w = jnp.concatenate([edge_weight.astype(jnp.float32),
                         jnp.ones((num_nodes,), jnp.float32)])   # self-loop fill=1
    deg = jnp.zeros((num_nodes,), jnp.float32).at[col].add(w)
    dinv = jnp.where(deg > 0, jax.lax.rsqrt(deg), 0.0)
    norm = dinv[row] * w * dinv[col]
    # aggregation at target i of messages from source j  ->  A[i, j]
    return jnp.zeros((pad_to, pad_to), jnp.float32).at[col, row].add(norm)


# ----------------------------------------------------------------------------
# Fused single-shot kernel (small graphs): everything resident in VMEM.
#   out = A2 @ (relu(A1 @ xw1 + b1) @ W2) + b2
# ----------------------------------------------------------------------------
def _gcn_fused_kernel(a1_ref, a2_ref, xw1_ref, b1_ref, w2_ref, b2_ref, o_ref):
    h = jnp.dot(a1_ref[...], xw1_ref[...], preferred_element_type=jnp.float32)
    h = jnp.maximum(h + b1_ref[...], 0.0)
    # TODO(synk): mcdropout=True path (F.dropout p=0.5, training=True) not
    #             implemented; default forward uses mcdropout=False.
    f2 = jnp.dot(h.astype(jnp.bfloat16), w2_ref[...],
                 preferred_element_type=jnp.float32).astype(jnp.bfloat16)
    o_ref[...] = (jnp.dot(a2_ref[...], f2, preferred_element_type=jnp.float32)
                  + b2_ref[...])


def gcn_fused(a1, a2, xw1, b1, w2, b2):
    n_pad, hid_pad = xw1.shape
    c_out_pad = w2.shape[1]
    vmem_spec = pl.BlockSpec(memory_space=pltpu.MemorySpace.VMEM)

    footprint = (a1.size * 2 + a2.size * 2 + xw1.size * 2 + w2.size * 2
                 + b1.size * 4 + b2.size * 4
                 + n_pad * hid_pad * 4            # h intermediate (f32)
                 + n_pad * c_out_pad * (2 + 4))   # f2 (bf16) + out (f32)
    flops = (2 * n_pad * n_pad * hid_pad
             + 2 * n_pad * hid_pad * c_out_pad
             + 2 * n_pad * n_pad * c_out_pad)

    return pl.pallas_call(
        _gcn_fused_kernel,
        out_shape=jax.ShapeDtypeStruct((n_pad, c_out_pad), jnp.float32),
        in_specs=[vmem_spec] * 6,
        out_specs=vmem_spec,
        compiler_params=pltpu.CompilerParams(
            vmem_limit_bytes=_vmem_limit(footprint)),
        cost_estimate=pl.CostEstimate(flops=flops, transcendentals=0,
                                      bytes_accessed=footprint),
    )(a1, a2, xw1, b1, w2, b2)


# ----------------------------------------------------------------------------
# Tiled layer kernel (large graphs): grid = (row tiles, K reduction tiles)
#   out_row_tile = finalize( sum_k A[i,k] @ F[k] )
# finalize = (+bias, optional relu, optional bf16 @ W)
# ----------------------------------------------------------------------------
def _gcn_layer_kernel(a_ref, f_ref, b_ref, *refs,
                      apply_relu, has_w, resident_f, tile_k):
    if has_w:
        w_ref, o_ref, acc_ref = refs
    else:
        w_ref = None
        o_ref, acc_ref = refs

    k = pl.program_id(1)

    @pl.when(k == 0)
    def _init():
        acc_ref[...] = jnp.zeros_like(acc_ref)

    if resident_f:
        ks = pl.multiple_of(k * tile_k, tile_k)
        f_tile = f_ref[pl.ds(ks, tile_k), :]
    else:
        f_tile = f_ref[...]

    # inner reduction step: pure MXU (bf16 inputs, f32 accumulation)
    acc_ref[...] += jnp.dot(a_ref[...], f_tile,
                            preferred_element_type=jnp.float32)

    @pl.when(k == pl.num_programs(1) - 1)
    def _finalize():
        y = acc_ref[...] + b_ref[...]
        if apply_relu:
            y = jnp.maximum(y, 0.0)
        if has_w:
            y = jnp.dot(y.astype(jnp.bfloat16), w_ref[...],
                        preferred_element_type=jnp.float32)
        o_ref[...] = y.astype(o_ref.dtype)


def gcn_layer(a, f, b, w, *, apply_relu, out_dtype, tile_m, tile_k):
    n_pad = a.shape[0]
    f_dim = f.shape[1]
    o_dim = w.shape[1] if w is not None else f_dim
    grid = (n_pad // tile_m, n_pad // tile_k)

    # Keep the feature operand VMEM-resident unless it is uncomfortably large.
    resident_f = n_pad * f_dim * f.dtype.itemsize <= 8 * 1024 * 1024
    if resident_f:
        f_spec = pl.BlockSpec((n_pad, f_dim), lambda i, k: (0, 0))
        f_buf_bytes = n_pad * f_dim * f.dtype.itemsize
    else:
        f_spec = pl.BlockSpec((tile_k, f_dim), lambda i, k: (k, 0))
        f_buf_bytes = 2 * tile_k * f_dim * f.dtype.itemsize

    in_specs = [
        pl.BlockSpec((tile_m, tile_k), lambda i, k: (i, k)),   # A row/K tile
        f_spec,                                                # features
        pl.BlockSpec((1, f_dim), lambda i, k: (0, 0)),         # bias resident
    ]
    args = [a, f, b]
    if w is not None:
        in_specs.append(pl.BlockSpec(w.shape, lambda i, k: (0, 0)))   # W resident
        args.append(w)

    out_itemsize = jnp.dtype(out_dtype).itemsize
    footprint = (2 * tile_m * tile_k * a.dtype.itemsize       # double-buffered A
                 + f_buf_bytes
                 + 2 * f_dim * 4
                 + (2 * w.size * w.dtype.itemsize if w is not None else 0)
                 + 2 * tile_m * o_dim * out_itemsize
                 + tile_m * f_dim * 4)                         # f32 accumulator

    flops = 2 * n_pad * n_pad * f_dim
    if w is not None:
        flops += 2 * n_pad * f_dim * o_dim
    bytes_accessed = (n_pad * n_pad * a.dtype.itemsize
                      + n_pad * f_dim * f.dtype.itemsize
                      + (w.size * w.dtype.itemsize if w is not None else 0)
                      + f_dim * 4
                      + n_pad * o_dim * out_itemsize)

    kernel = functools.partial(_gcn_layer_kernel, apply_relu=apply_relu,
                               has_w=w is not None, resident_f=resident_f,
                               tile_k=tile_k)
    return pl.pallas_call(
        kernel,
        out_shape=jax.ShapeDtypeStruct((n_pad, o_dim), out_dtype),
        grid=grid,
        in_specs=in_specs,
        out_specs=pl.BlockSpec((tile_m, o_dim), lambda i, k: (i, 0)),
        scratch_shapes=[pltpu.VMEM((tile_m, f_dim), jnp.float32)],
        compiler_params=pltpu.CompilerParams(
            dimension_semantics=("parallel", "arbitrary"),
            vmem_limit_bytes=_vmem_limit(footprint)),
        cost_estimate=pl.CostEstimate(flops=flops, transcendentals=0,
                                      bytes_accessed=bytes_accessed),
    )(*args)


# ----------------------------------------------------------------------------
# Wrapper: build padded operands, dispatch fused (small n) or tiled (large n)
# ----------------------------------------------------------------------------
def gcn_forward(x, edge_index, edge_weight, w1, b1, w2, b2, *, tile_override=None):
    n, _ = x.shape
    hid = w1.shape[1]
    c_out = w2.shape[1]
    hid_pad = _round_up(hid, LANE)
    c_out_pad = _round_up(c_out, LANE)

    if tile_override is not None:
        fused = False
        tile_m, tile_k = tile_override
        assert max(tile_m, tile_k) % min(tile_m, tile_k) == 0
        n_pad = _round_up(n, max(tile_m, tile_k))
    elif n <= 1024:
        fused = True
        tile_m = tile_k = n_pad = _round_up(n, LANE)
    else:
        fused = False
        tile_m = 512
        tile_k = 2048 if n > 4096 else 1024
        n_pad = _round_up(n, tile_k)   # tile_k is a multiple of tile_m

    # Dense normalized adjacencies built directly at padded size (bf16 for MXU).
    a1 = gcn_norm_dense(edge_index, edge_weight, n, n_pad).astype(jnp.bfloat16)
    a2 = gcn_norm_dense(edge_index, None, n, n_pad).astype(jnp.bfloat16)

    # GCNConv applies the dense transform before aggregation -> fold W1 into the
    # features so layer 1's feature width is the lane-dense hid_pad, not c_in.
    xw1 = jnp.zeros((n_pad, hid_pad), jnp.bfloat16).at[:n, :hid].set(
        (x @ w1).astype(jnp.bfloat16))
    b1p = jnp.zeros((1, hid_pad), jnp.float32).at[:, :hid].set(b1.reshape(1, hid))
    w2p = jnp.zeros((hid_pad, c_out_pad), jnp.bfloat16).at[:hid, :c_out].set(
        w2.astype(jnp.bfloat16))
    b2p = jnp.zeros((1, c_out_pad), jnp.float32).at[:, :c_out].set(b2.reshape(1, c_out))

    if fused:
        out = gcn_fused(a1, a2, xw1, b1p, w2p, b2p)
    else:
        # layer 1 (+ W2 folded into finalize): f2 = relu(A1 @ xw1 + b1) @ W2
        f2 = gcn_layer(a1, xw1, b1p, w2p, apply_relu=True,
                       out_dtype=jnp.bfloat16, tile_m=tile_m, tile_k=tile_k)
        # layer 2: out = A2 @ f2 + b2   (pure reduction, no finalize matmul)
        out = gcn_layer(a2, f2, b2p, None, apply_relu=False,
                        out_dtype=jnp.float32, tile_m=tile_m, tile_k=tile_k)
    return out[:n, :c_out]


# ----------------------------------------------------------------------------
# Pure-JAX f32 reference for correctness check
# ----------------------------------------------------------------------------
def gcn_forward_ref(a1, a2, x, w1, b1, w2, b2):
    h = jnp.maximum(a1 @ (x @ w1) + b1, 0.0)
    return a2 @ (h @ w2) + b2


if __name__ == "__main__":
    key = jax.random.PRNGKey(0)
    N, C_IN, HID, C_OUT, E = 256, 4, 32, 3, 1024

    k_x, k_src, k_dst, k_w, k_w1, k_w2 = jax.random.split(key, 6)

    x = jax.random.normal(k_x, (N, C_IN), dtype=jnp.float32)
    edge_index = jnp.stack(
        [jax.random.randint(k_src, (E,), 0, N),
         jax.random.randint(k_dst, (E,), 0, N)], axis=0).astype(jnp.int32)
    edge_weight = jax.random.uniform(k_w, (E,), dtype=jnp.float32,
                                     minval=0.1, maxval=1.0)

    # GCNConv parameters (glorot-ish scale, zero bias like torch default)
    w1 = jax.random.normal(k_w1, (C_IN, HID), dtype=jnp.float32) * (1.0 / jnp.sqrt(C_IN))
    b1 = jnp.zeros((HID,), dtype=jnp.float32)
    w2 = jax.random.normal(k_w2, (HID, C_OUT), dtype=jnp.float32) * (1.0 / jnp.sqrt(HID))
    b2 = jnp.zeros((C_OUT,), dtype=jnp.float32)

    # f32 reference adjacencies (conv1 uses edge_attr, conv2 unit weights)
    a1_ref = gcn_norm_dense(edge_index, edge_weight, N)
    a2_ref = gcn_norm_dense(edge_index, None, N)
    ref = gcn_forward_ref(a1_ref, a2_ref, x, w1, b1, w2, b2)

    # fused single-shot path (small graph)
    out = gcn_forward(x, edge_index, edge_weight, w1, b1, w2, b2)
    out = jax.block_until_ready(out)
    assert out.shape == (N, C_OUT)
    assert jnp.allclose(out, ref, atol=5e-2, rtol=5e-2), \
        float(jnp.max(jnp.abs(out - ref)))

    # tiled grid path (exercised here with small tiles for coverage)
    out_t = gcn_forward(x, edge_index, edge_weight, w1, b1, w2, b2,
                        tile_override=(128, 128))
    out_t = jax.block_until_ready(out_t)
    assert jnp.allclose(out_t, ref, atol=5e-2, rtol=5e-2), \
        float(jnp.max(jnp.abs(out_t - ref)))

    print("KERNEL_OK")
</pallas_src>

<mosaic_0001>
module attributes {stable_mosaic.version = 11 : i64} {
  func.func @_gcn_fused_kernel(%arg0: memref<256x256xbf16, #tpu.memory_space<vmem>>, %arg1: memref<256x256xbf16, #tpu.memory_space<vmem>>, %arg2: memref<256x128xbf16, #tpu.memory_space<vmem>>, %arg3: memref<1x128xf32, #tpu.memory_space<vmem>>, %arg4: memref<128x128xbf16, #tpu.memory_space<vmem>>, %arg5: memref<1x128xf32, #tpu.memory_space<vmem>>, %arg6: memref<256x128xf32, #tpu.memory_space<vmem>>) attributes {dimension_semantics = [], scalar_prefetch = 0 : i64, scratch_operands = 0 : i64, tpu.core_type = #tpu.core_type<tc>} {
    %c0 = arith.constant 0 : index
    %c0_0 = arith.constant 0 : index
    %0 = vector.load %arg0[%c0, %c0_0] : memref<256x256xbf16, #tpu.memory_space<vmem>>, vector<256x256xbf16>
    %c0_1 = arith.constant 0 : index
    %c0_2 = arith.constant 0 : index
    %1 = vector.load %arg2[%c0_1, %c0_2] : memref<256x128xbf16, #tpu.memory_space<vmem>>, vector<256x128xbf16>
    %cst = arith.constant dense<0.000000e+00> : vector<256x128xf32>
    %2 = tpu.matmul %0, %1, %cst {dimension_numbers = #tpu.dot_dimension_numbers<[1], [0], [0], [1], [0, 0, 1, 1], [], []>} : vector<256x256xbf16>, vector<256x128xbf16>, vector<256x128xf32> -> vector<256x128xf32>
    %c0_3 = arith.constant 0 : index
    %c0_4 = arith.constant 0 : index
    %3 = vector.load %arg3[%c0_3, %c0_4] : memref<1x128xf32, #tpu.memory_space<vmem>>, vector<1x128xf32>
    %4 = vector.broadcast %3 : vector<1x128xf32> to vector<256x128xf32>
    %5 = arith.addf %2, %4 : vector<256x128xf32>
    %cst_5 = arith.constant 0.000000e+00 : f32
    %6 = vector.broadcast %cst_5 : f32 to vector<256x128xf32>
    %7 = arith.maximumf %5, %6 : vector<256x128xf32>
    %8 = arith.truncf %7 : vector<256x128xf32> to vector<256x128xbf16>
    %c0_6 = arith.constant 0 : index
    %c0_7 = arith.constant 0 : index
    %9 = vector.load %arg4[%c0_6, %c0_7] : memref<128x128xbf16, #tpu.memory_space<vmem>>, vector<128x128xbf16>
    %cst_8 = arith.constant dense<0.000000e+00> : vector<256x128xf32>
    %10 = tpu.matmul %8, %9, %cst_8 {dimension_numbers = #tpu.dot_dimension_numbers<[1], [0], [0], [1], [0, 0, 1, 1], [], []>} : vector<256x128xbf16>, vector<128x128xbf16>, vector<256x128xf32> -> vector<256x128xf32>
    %11 = arith.truncf %10 : vector<256x128xf32> to vector<256x128xbf16>
    %c0_9 = arith.constant 0 : index
    %c0_10 = arith.constant 0 : index
    %12 = vector.load %arg1[%c0_9, %c0_10] : memref<256x256xbf16, #tpu.memory_space<vmem>>, vector<256x256xbf16>
    %cst_11 = arith.constant dense<0.000000e+00> : vector<256x128xf32>
    %13 = tpu.matmul %12, %11, %cst_11 {dimension_numbers = #tpu.dot_dimension_numbers<[1], [0], [0], [1], [0, 0, 1, 1], [], []>} : vector<256x256xbf16>, vector<256x128xbf16>, vector<256x128xf32> -> vector<256x128xf32>
    %c0_12 = arith.constant 0 : index
    %c0_13 = arith.constant 0 : index
    %14 = vector.load %arg5[%c0_12, %c0_13] : memref<1x128xf32, #tpu.memory_space<vmem>>, vector<1x128xf32>
    %15 = vector.broadcast %14 : vector<1x128xf32> to vector<256x128xf32>
    %16 = arith.addf %13, %15 : vector<256x128xf32>
    %c0_14 = arith.constant 0 : index
    %c0_15 = arith.constant 0 : index
    %17 = vector.load %arg6[%c0_14, %c0_15] : memref<256x128xf32, #tpu.memory_space<vmem>>, vector<256x128xf32>
    tpu.vector_store %arg6[%c0_14, %c0_15], %16 {strides = array<i32>} : memref<256x128xf32, #tpu.memory_space<vmem>>, vector<256x128xf32>,
    return
  }
}

</mosaic_0001>

<llo_original>
// kernel: tpu_custom_call.1
$region0: #{tpu_custom_call.1}
  #allocation0 [shape = 'u32[]', space=smem, size = 0x4, offset = 0x4, fixed_abs, tag = 'smem constant byte address 0x4 - core index']
  #allocation1 [shape = 'u32[144,128]{1,0:T(1,128)}', space=vmem, size = 0x12000, scoped, tag = 'internal scratch']
  %s0 = inlined_call_operand.hbm [shape: bf16[256,256], index: 0, kind: input, shape index: {}]
  %s1 = inlined_call_operand.hbm [shape: bf16[256,256], index: 1, kind: input, shape index: {}]
  %s2 = inlined_call_operand.hbm [shape: bf16[256,128], index: 2, kind: input, shape index: {}]
  %s3 = inlined_call_operand.vmem [shape: f32[1,128], index: 3, kind: input, shape index: {}]
  %s4 = inlined_call_operand.hbm [shape: bf16[128,128], index: 4, kind: input, shape index: {}]
  %s5 = inlined_call_operand.vmem [shape: f32[1,128], index: 5, kind: input, shape index: {}]
  %s6 = inlined_call_operand.hbm [shape: f32[256,128], index: 6, kind: output, shape index: {}]
  %s7 = sld [smem:[#allocation0]]
  $region50: #{tpu_custom_call.1} parent=0
    _
  %s9 = ssub.s32 1, %s7
  %s10 = scalar_select 0, %s9, %s7
  $region1: #{tpu_custom_call.1} parent=0
    #allocation2 [shape = 'u8[131072]{0}', space=vmem, size = 0x20000, scoped, tag = 'input window, operand 0, single buffered']
    #allocation3 [shape = 's32[1]{0}', space=sflag, size = 0x4, scoped, tag = 'scoped memory for tpu_custom_call.1']
    #allocation4 [shape = 's32[1]{0}', space=sflag, size = 0x4, scoped, tag = 'scoped memory for tpu_custom_call.1']
    #allocation5 [shape = 'u8[131072]{0}', space=vmem, size = 0x20000, scoped, tag = 'input window, operand 1, single buffered']
    #allocation6 [shape = 's32[1]{0}', space=sflag, size = 0x4, scoped, tag = 'scoped memory for tpu_custom_call.1']
    #allocation7 [shape = 'u8[65536]{0}', space=vmem, size = 0x10000, scoped, tag = 'input window, operand 2, single buffered']
    #allocation8 [shape = 'u8[32768]{0}', space=vmem, size = 0x8000, scoped, tag = 'input window, operand 4, single buffered']
    #allocation9 [shape = 's32[1]{0}', space=sflag, size = 0x4, scoped, tag = 'scoped memory for tpu_custom_call.1']
    #allocation10 [shape = 'u8[131072]{0}', space=vmem, size = 0x20000, scoped, tag = 'output window, operand 0, single buffered']
    %11 = vsyncpa [#allocation3], 0
    %12 = vsyncpa [#allocation6], 0
    %13 = vsyncpa [#allocation9], 0
    %14 = vsyncpa [#allocation4], 0
    // Predicated region
    $region2: #{tpu_custom_call.1} parent=1 // pred_check
      _
    $region3: #{tpu_custom_call.1} parent=1 // pred_check_branch
      %16 = sbr.rel (0) target = $region5
    $region4: #{tpu_custom_call.1} parent=1 // pred_region
      %s18 = ssub.s32 4096, 4096
      %19 = vsyncadd [#allocation3], %s18
      %s20 = sshll.u32 [#allocation2], 4
      %s21 = int_to_ptr.vmem [resolvable:$true] %s20
      %26 = dma.hbm_to_vmem [thread:$0]  %s0, 4096, %s21, [#allocation3], 128, 128, 8
    $region5: #{tpu_custom_call.1} parent=1 // pred_fallthru
      _
    // Predicated region
    $region6: #{tpu_custom_call.1} parent=1 // pred_check
      _
    $region7: #{tpu_custom_call.1} parent=1 // pred_check_branch
      %28 = sbr.rel (0) target = $region9
    $region8: #{tpu_custom_call.1} parent=1 // pred_region
      %s30 = ssub.s32 4096, 4096
      %31 = vsyncadd [#allocation6], %s30
      %s32 = sshll.u32 [#allocation5], 4
      %s33 = int_to_ptr.vmem [resolvable:$true] %s32
      %38 = dma.hbm_to_vmem [thread:$0]  %s1, 4096, %s33, [#allocation6], 128, 128, 8
    $region9: #{tpu_custom_call.1} parent=1 // pred_fallthru
      _
    // Predicated region
    $region10: #{tpu_custom_call.1} parent=1 // pred_check
      _
    $region11: #{tpu_custom_call.1} parent=1 // pred_check_branch
      %40 = sbr.rel (0) target = $region13
    $region12: #{tpu_custom_call.1} parent=1 // pred_region
      %s42 = ssub.s32 2048, 2048
      %43 = vsyncadd [#allocation6], %s42
      %s44 = sshll.u32 [#allocation7], 4
      %s45 = int_to_ptr.vmem [resolvable:$true] %s44
      %50 = dma.hbm_to_vmem [thread:$0]  %s2, 2048, %s45, [#allocation6], 64, 64, 4
    $region13: #{tpu_custom_call.1} parent=1 // pred_fallthru
      _
    // Predicated region
    $region14: #{tpu_custom_call.1} parent=1 // pred_check
      _
    $region15: #{tpu_custom_call.1} parent=1 // pred_check_branch
      %52 = sbr.rel (0) target = $region17
    $region16: #{tpu_custom_call.1} parent=1 // pred_region
      _
    $region17: #{tpu_custom_call.1} parent=1 // pred_fallthru
      _
    // Predicated region
    $region18: #{tpu_custom_call.1} parent=1 // pred_check
      _
    $region19: #{tpu_custom_call.1} parent=1 // pred_check_branch
      %54 = sbr.rel (0) target = $region21
    $region20: #{tpu_custom_call.1} parent=1 // pred_region
      %s56 = ssub.s32 1024, 1024
      %57 = vsyncadd [#allocation9], %s56
      %s58 = sshll.u32 [#allocation8], 4
      %s59 = int_to_ptr.vmem [resolvable:$true] %s58
      %64 = dma.hbm_to_vmem [thread:$0]  %s4, 1024, %s59, [#allocation9], 64, 64, 4
    $region21: #{tpu_custom_call.1} parent=1 // pred_fallthru
      _
    // Predicated region
    $region22: #{tpu_custom_call.1} parent=1 // pred_check
      _
    $region23: #{tpu_custom_call.1} parent=1 // pred_check_branch
      %66 = sbr.rel (0) target = $region25
    $region24: #{tpu_custom_call.1} parent=1 // pred_region
      _
    $region25: #{tpu_custom_call.1} parent=1 // pred_fallthru
      _
    // Predicated region
    $region26: #{tpu_custom_call.1} parent=1 // pred_check
      _
    $region27: #{tpu_custom_call.1} parent=1 // pred_check_branch
      %68 = sbr.rel (0) target = $region29
    $region28: #{tpu_custom_call.1} parent=1 // pred_region
      %69 = dma.done [#allocation3], 4096
    $region29: #{tpu_custom_call.1} parent=1 // pred_fallthru
      _
    // Predicated region
    $region30: #{tpu_custom_call.1} parent=1 // pred_check
      _
    $region31: #{tpu_custom_call.1} parent=1 // pred_check_branch
      %71 = sbr.rel (0) target = $region33
    $region32: #{tpu_custom_call.1} parent=1 // pred_region
      %72 = dma.done [#allocation6], 4096
    $region33: #{tpu_custom_call.1} parent=1 // pred_fallthru
      _
    // Predicated region
    $region34: #{tpu_custom_call.1} parent=1 // pred_check
      _
    $region35: #{tpu_custom_call.1} parent=1 // pred_check_branch
      %74 = sbr.rel (0) target = $region37
    $region36: #{tpu_custom_call.1} parent=1 // pred_region
      %75 = dma.done [#allocation6], 2048
    $region37: #{tpu_custom_call.1} parent=1 // pred_fallthru
      _
    // Predicated region
    $region38: #{tpu_custom_call.1} parent=1 // pred_check
      _
    $region39: #{tpu_custom_call.1} parent=1 // pred_check_branch
      %77 = sbr.rel (0) target = $region41
    $region40: #{tpu_custom_call.1} parent=1 // pred_region
      %78 = dma.done [#allocation9], 1024
    $region41: #{tpu_custom_call.1} parent=1 // pred_fallthru
      _
    %v80 = vld [vmem:[#allocation2] sm:$0xff]
    %v81 = vld [vmem:[#allocation2 + $0x8] sm:$0xff]
    %v82 = vld [vmem:[#allocation2 + $0x10] sm:$0xff]
    %v83 = vld [vmem:[#allocation2 + $0x18] sm:$0xff]
    %v84 = vld [vmem:[#allocation2 + $0x20] sm:$0xff]
    %v85 = vld [vmem:[#allocation2 + $0x28] sm:$0xff]
    %v86 = vld [vmem:[#allocation2 + $0x30] sm:$0xff]
    %v87 = vld [vmem:[#allocation2 + $0x38] sm:$0xff]
    %v88 = vld [vmem:[#allocation2 + $0x40] sm:$0xff]
    %v89 = vld [vmem:[#allocation2 + $0x48] sm:$0xff]
    %v90 = vld [vmem:[#allocation2 + $0x50] sm:$0xff]
    %v91 = vld [vmem:[#allocation2 + $0x58] sm:$0xff]
    %v92 = vld [vmem:[#allocation2 + $0x60] sm:$0xff]
    %v93 = vld [vmem:[#allocation2 + $0x68] sm:$0xff]
    %v94 = vld [vmem:[#allocation2 + $0x70] sm:$0xff]
    %v95 = vld [vmem:[#allocation2 + $0x78] sm:$0xff]
    %v96 = vld [vmem:[#allocation2 + $0x80] sm:$0xff]
    %v97 = vld [vmem:[#allocation2 + $0x88] sm:$0xff]
    %v98 = vld [vmem:[#allocation2 + $0x90] sm:$0xff]
    %v99 = vld [vmem:[#allocation2 + $0x98] sm:$0xff]
    %v100 = vld [vmem:[#allocation2 + $0xa0] sm:$0xff]
    %v101 = vld [vmem:[#allocation2 + $0xa8] sm:$0xff]
    %v102 = vld [vmem:[#allocation2 + $0xb0] sm:$0xff]
    %v103 = vld [vmem:[#allocation2 + $0xb8] sm:$0xff]
    %v104 = vld [vmem:[#allocation2 + $0xc0] sm:$0xff]
    %v105 = vld [vmem:[#allocation2 + $0xc8] sm:$0xff]
    %v106 = vld [vmem:[#allocation2 + $0xd0] sm:$0xff]
    %v107 = vld [vmem:[#allocation2 + $0xd8] sm:$0xff]
    %v108 = vld [vmem:[#allocation2 + $0xe0] sm:$0xff]
    %v109 = vld [vmem:[#allocation2 + $0xe8] sm:$0xff]
    %v110 = vld [vmem:[#allocation2 + $0xf0] sm:$0xff]
    %v111 = vld [vmem:[#allocation2 + $0xf8] sm:$0xff]
    %v112 = vld [vmem:[#allocation7] sm:$0xf]
    %v113 = vld [vmem:[#allocation7 + $0x4] sm:$0xf]
    %v114 = vld [vmem:[#allocation7 + $0x8] sm:$0xf]
    %v115 = vld [vmem:[#allocation7 + $0xc] sm:$0xf]
    %v116 = vld [vmem:[#allocation7 + $0x10] sm:$0xf]
    %v117 = vld [vmem:[#allocation7 + $0x14] sm:$0xf]
    %v118 = vld [vmem:[#allocation7 + $0x18] sm:$0xf]
    %v119 = vld [vmem:[#allocation7 + $0x1c] sm:$0xf]
    %v120 = vld [vmem:[#allocation7 + $0x20] sm:$0xf]
    %v121 = vld [vmem:[#allocation7 + $0x24] sm:$0xf]
    %v122 = vld [vmem:[#allocation7 + $0x28] sm:$0xf]
    %v123 = vld [vmem:[#allocation7 + $0x2c] sm:$0xf]
    %v124 = vld [vmem:[#allocation7 + $0x30] sm:$0xf]
    %v125 = vld [vmem:[#allocation7 + $0x34] sm:$0xf]
    %v126 = vld [vmem:[#allocation7 + $0x38] sm:$0xf]
    %v127 = vld [vmem:[#allocation7 + $0x3c] sm:$0xf]
    %v128 = vld [vmem:[#allocation7 + $0x40] sm:$0xf]
    %v129 = vld [vmem:[#allocation7 + $0x44] sm:$0xf]
    %v130 = vld [vmem:[#allocation7 + $0x48] sm:$0xf]
    %v131 = vld [vmem:[#allocation7 + $0x4c] sm:$0xf]
    %v132 = vld [vmem:[#allocation7 + $0x50] sm:$0xf]
    %v133 = vld [vmem:[#allocation7 + $0x54] sm:$0xf]
    %v134 = vld [vmem:[#allocation7 + $0x58] sm:$0xf]
    %v135 = vld [vmem:[#allocation7 + $0x5c] sm:$0xf]
    %v136 = vld [vmem:[#allocation7 + $0x60] sm:$0xf]
    %v137 = vld [vmem:[#allocation7 + $0x64] sm:$0xf]
    %v138 = vld [vmem:[#allocation7 + $0x68] sm:$0xf]
    %v139 = vld [vmem:[#allocation7 + $0x6c] sm:$0xf]
    %v140 = vld [vmem:[#allocation7 + $0x70] sm:$0xf]
    %v141 = vld [vmem:[#allocation7 + $0x74] sm:$0xf]
    %v142 = vld [vmem:[#allocation7 + $0x78] sm:$0xf]
    %v143 = vld [vmem:[#allocation7 + $0x7c] sm:$0xf]
    %v144 = vld [vmem:[%s3] sm:$0x1]
    %v146 = vlaneseq
    %v147 = vshrl.u32 %v146, 7
    %v148 = vsub.s32 0, %v147
    %v149 = vrot.slane %v144, %v148
    %v183 = vunpack.c.l.b16 %v80
    %v184 = vunpack.c.h.b16 %v80
    %v185 = vunpack.c.l.b16 %v81
    %v186 = vunpack.c.h.b16 %v81
    %v187 = vunpack.c.l.b16 %v82
    %v188 = vunpack.c.h.b16 %v82
    %v189 = vunpack.c.l.b16 %v83
    %v190 = vunpack.c.h.b16 %v83
    %v191 = vunpack.c.l.b16 %v84
    %v192 = vunpack.c.h.b16 %v84
    %v193 = vunpack.c.l.b16 %v85
    %v194 = vunpack.c.h.b16 %v85
    %v195 = vunpack.c.l.b16 %v86
    %v196 = vunpack.c.h.b16 %v86
    %v197 = vunpack.c.l.b16 %v87
    %v198 = vunpack.c.h.b16 %v87
    %v199 = vunpack.c.l.b16 %v88
    %v200 = vunpack.c.h.b16 %v88
    %v201 = vunpack.c.l.b16 %v89
    %v202 = vunpack.c.h.b16 %v89
    %v203 = vunpack.c.l.b16 %v90
    %v204 = vunpack.c.h.b16 %v90
    %v205 = vunpack.c.l.b16 %v91
    %v206 = vunpack.c.h.b16 %v91
    %v207 = vunpack.c.l.b16 %v92
    %v208 = vunpack.c.h.b16 %v92
    %v209 = vunpack.c.l.b16 %v93
    %v210 = vunpack.c.h.b16 %v93
    %v211 = vunpack.c.l.b16 %v94
    %v212 = vunpack.c.h.b16 %v94
    %v213 = vunpack.c.l.b16 %v95
    %v214 = vunpack.c.h.b16 %v95
    %v215 = vunpack.c.l.b16 %v96
    %v216 = vunpack.c.h.b16 %v96
    %v217 = vunpack.c.l.b16 %v97
    %v218 = vunpack.c.h.b16 %v97
    %v219 = vunpack.c.l.b16 %v98
    %v220 = vunpack.c.h.b16 %v98
    %v221 = vunpack.c.l.b16 %v99
    %v222 = vunpack.c.h.b16 %v99
    %v223 = vunpack.c.l.b16 %v100
    %v224 = vunpack.c.h.b16 %v100
    %v225 = vunpack.c.l.b16 %v101
    %v226 = vunpack.c.h.b16 %v101
    %v227 = vunpack.c.l.b16 %v102
    %v228 = vunpack.c.h.b16 %v102
    %v229 = vunpack.c.l.b16 %v103
    %v230 = vunpack.c.h.b16 %v103
    %v231 = vunpack.c.l.b16 %v104
    %v232 = vunpack.c.h.b16 %v104
    %v233 = vunpack.c.l.b16 %v105
    %v234 = vunpack.c.h.b16 %v105
    %v235 = vunpack.c.l.b16 %v106
    %v236 = vunpack.c.h.b16 %v106
    %v237 = vunpack.c.l.b16 %v107
    %v238 = vunpack.c.h.b16 %v107
    %v239 = vunpack.c.l.b16 %v108
    %v240 = vunpack.c.h.b16 %v108
    %v241 = vunpack.c.l.b16 %v109
    %v242 = vunpack.c.h.b16 %v109
    %v243 = vunpack.c.l.b16 %v110
    %v244 = vunpack.c.h.b16 %v110
    %v245 = vunpack.c.l.b16 %v111
    %v246 = vunpack.c.h.b16 %v111
    %v247 = vpack.c.b16 %v185, %v183
    %v248 = vpack.c.b16 %v186, %v184
    %v249 = vpack.c.b16 %v189, %v187
    %v250 = vpack.c.b16 %v190, %v188
    %v251 = vpack.c.b16 %v193, %v191
    %v252 = vpack.c.b16 %v194, %v192
    %v253 = vpack.c.b16 %v197, %v195
    %v254 = vpack.c.b16 %v198, %v196
    %v255 = vpack.c.b16 %v201, %v199
    %v256 = vpack.c.b16 %v202, %v200
    %v257 = vpack.c.b16 %v205, %v203
    %v258 = vpack.c.b16 %v206, %v204
    %v259 = vpack.c.b16 %v209, %v207
    %v260 = vpack.c.b16 %v210, %v208
    %v261 = vpack.c.b16 %v213, %v211
    %v262 = vpack.c.b16 %v214, %v212
    %v263 = vpack.c.b16 %v217, %v215
    %v264 = vpack.c.b16 %v218, %v216
    %v265 = vpack.c.b16 %v221, %v219
    %v266 = vpack.c.b16 %v222, %v220
    %v267 = vpack.c.b16 %v225, %v223
    %v268 = vpack.c.b16 %v226, %v224
    %v269 = vpack.c.b16 %v229, %v227
    %v270 = vpack.c.b16 %v230, %v228
    %v271 = vpack.c.b16 %v233, %v231
    %v272 = vpack.c.b16 %v234, %v232
    %v273 = vpack.c.b16 %v237, %v235
    %v274 = vpack.c.b16 %v238, %v236
    %v275 = vpack.c.b16 %v241, %v239
    %v276 = vpack.c.b16 %v242, %v240
    %v277 = vpack.c.b16 %v245, %v243
    %v278 = vpack.c.b16 %v246, %v244
    %v343 = vunpack.c.l.b16 %v112
    %v344 = vunpack.c.l.b16 %v113
    %v345 = vunpack.c.l.b16 %v114
    %v346 = vunpack.c.l.b16 %v115
    %v347 = vunpack.c.l.b16 %v116
    %v348 = vunpack.c.l.b16 %v117
    %v349 = vunpack.c.l.b16 %v118
    %v350 = vunpack.c.l.b16 %v119
    %v351 = vunpack.c.l.b16 %v120
    %v352 = vunpack.c.l.b16 %v121
    %v353 = vunpack.c.l.b16 %v122
    %v354 = vunpack.c.l.b16 %v123
    %v355 = vunpack.c.l.b16 %v124
    %v356 = vunpack.c.l.b16 %v125
    %v357 = vunpack.c.l.b16 %v126
    %v358 = vunpack.c.l.b16 %v127
    %v359 = vunpack.c.l.b16 %v128
    %v360 = vunpack.c.l.b16 %v129
    %v361 = vunpack.c.l.b16 %v130
    %v362 = vunpack.c.l.b16 %v131
    %v363 = vunpack.c.l.b16 %v132
    %v364 = vunpack.c.l.b16 %v133
    %v365 = vunpack.c.l.b16 %v134
    %v366 = vunpack.c.l.b16 %v135
    %v367 = vunpack.c.l.b16 %v136
    %v368 = vunpack.c.l.b16 %v137
    %v369 = vunpack.c.l.b16 %v138
    %v370 = vunpack.c.l.b16 %v139
    %v371 = vunpack.c.l.b16 %v140
    %v372 = vunpack.c.l.b16 %v141
    %v373 = vunpack.c.l.b16 %v142
    %v374 = vunpack.c.l.b16 %v143
    %v375 = vpack.c.b16 %v344, %v343
    %v376 = vpack.c.b16 %v346, %v345
    %v377 = vpack.c.b16 %v348, %v347
    %v378 = vpack.c.b16 %v350, %v349
    %v379 = vpack.c.b16 %v352, %v351
    %v380 = vpack.c.b16 %v354, %v353
    %v381 = vpack.c.b16 %v356, %v355
    %v382 = vpack.c.b16 %v358, %v357
    %v383 = vpack.c.b16 %v360, %v359
    %v384 = vpack.c.b16 %v362, %v361
    %v385 = vpack.c.b16 %v364, %v363
    %v386 = vpack.c.b16 %v366, %v365
    %v387 = vpack.c.b16 %v368, %v367
    %v388 = vpack.c.b16 %v370, %v369
    %v389 = vpack.c.b16 %v372, %v371
    %v390 = vpack.c.b16 %v374, %v373
    %407 = vmatprep.subr.bf16.mxu0 0
    %408 = vmatpush1.bf16.msra.mxu0 %v382
    %409 = vmatprep.subr.bf16.mxu0 0
    %410 = vmatpush1.bf16.msra.mxu0 %v381
    %411 = vmatprep.subr.bf16.mxu0 0
    %412 = vmatpush1.bf16.msra.mxu0 %v380
    %413 = vmatprep.subr.bf16.mxu0 0
    %414 = vmatpush1.bf16.msra.mxu0 %v379
    %415 = vmatprep.subr.bf16.mxu0 0
    %416 = vmatpush1.bf16.msra.mxu0 %v378
    %417 = vmatprep.subr.bf16.mxu0 0
    %418 = vmatpush1.bf16.msra.mxu0 %v377
    %419 = vmatprep.subr.bf16.mxu0 0
    %420 = vmatpush1.bf16.msra.mxu0 %v376
    %421 = vmatprep.subr.bf16.mxu0 0
    %422 = vmatpush1.bf16.msra.mxu0 %v375
    %423 = vmatprep.subr.bf16.mxu0 0
    %424 = vmatpush2.bf16.msra.mxu0 %v390
    %425 = vmatprep.subr.bf16.mxu0 0
    %426 = vmatpush2.bf16.msra.mxu0 %v389
    %427 = vmatprep.subr.bf16.mxu0 0
    %428 = vmatpush2.bf16.msra.mxu0 %v388
    %429 = vmatprep.subr.bf16.mxu0 0
    %430 = vmatpush2.bf16.msra.mxu0 %v387
    %431 = vmatprep.subr.bf16.mxu0 0
    %432 = vmatpush2.bf16.msra.mxu0 %v386
    %433 = vmatprep.subr.bf16.mxu0 0
    %434 = vmatpush2.bf16.msra.mxu0 %v385
    %435 = vmatprep.subr.bf16.mxu0 0
    %436 = vmatpush2.bf16.msra.mxu0 %v384
    %437 = vmatprep.subr.bf16.mxu0 0
    %438 = vmatpush2.bf16.msra.mxu0 %v383
    %439 = vmatprep.mubr.bf16.mxu0 %v248
    %440 = vmatmul.mubr.bf16.gmra.mxu0 %v247
    %v441 = vpop.f32.mrf.mxu0
    %v442 = vadd.f32 %v149, %v441
    %v443 = vpop.f32.mrf.mxu0
    %v444 = vpop.f32.mrf.mxu0
    %v445 = vadd.f32 %v149, %v444
    %v446 = vpop.f32.mrf.mxu0
    %447 = vmatprep.mubr.bf16.mxu0 %v250
    %448 = vmatmul.mubr.bf16.gmra.mxu0 %v249
    %v449 = vpop.f32.mrf.mxu0
    %v450 = vadd.f32 %v149, %v449
    %v451 = vpop.f32.mrf.mxu0
    %v452 = vpop.f32.mrf.mxu0
    %v453 = vadd.f32 %v149, %v452
    %v454 = vpop.f32.mrf.mxu0
    %455 = vmatprep.mubr.bf16.mxu0 %v252
    %456 = vmatmul.mubr.bf16.gmra.mxu0 %v251
    %v457 = vpop.f32.mrf.mxu0
    %v458 = vadd.f32 %v149, %v457
    %v459 = vpop.f32.mrf.mxu0
    %v460 = vpop.f32.mrf.mxu0
    %v461 = vadd.f32 %v149, %v460
    %v462 = vpop.f32.mrf.mxu0
    %463 = vmatprep.mubr.bf16.mxu0 %v254
    %464 = vmatmul.mubr.bf16.gmra.mxu0 %v253
    %v465 = vpop.f32.mrf.mxu0
    %v466 = vadd.f32 %v149, %v465
    %v467 = vpop.f32.mrf.mxu0
    %v468 = vpop.f32.mrf.mxu0
    %v469 = vadd.f32 %v149, %v468
    %v470 = vpop.f32.mrf.mxu0
    %471 = vmatprep.mubr.bf16.mxu0 %v256
    %472 = vmatmul.mubr.bf16.gmra.mxu0 %v255
    %v473 = vpop.f32.mrf.mxu0
    %v474 = vadd.f32 %v149, %v473
    %v475 = vpop.f32.mrf.mxu0
    %v476 = vpop.f32.mrf.mxu0
    %v477 = vadd.f32 %v149, %v476
    %v478 = vpop.f32.mrf.mxu0
    %479 = vmatprep.mubr.bf16.mxu0 %v258
    %480 = vmatmul.mubr.bf16.gmra.mxu0 %v257
    %v481 = vpop.f32.mrf.mxu0
    %v482 = vadd.f32 %v149, %v481
    %v483 = vpop.f32.mrf.mxu0
    %v484 = vpop.f32.mrf.mxu0
    %v485 = vadd.f32 %v149, %v484
    %v486 = vpop.f32.mrf.mxu0
    %487 = vmatprep.mubr.bf16.mxu0 %v260
    %488 = vmatmul.mubr.bf16.gmra.mxu0 %v259
    %v489 = vpop.f32.mrf.mxu0
    %v490 = vadd.f32 %v149, %v489
    %v491 = vpop.f32.mrf.mxu0
    %v492 = vpop.f32.mrf.mxu0
    %v493 = vadd.f32 %v149, %v492
    %v494 = vpop.f32.mrf.mxu0
    %495 = vmatprep.mubr.bf16.mxu0 %v262
    %496 = vmatmul.mubr.bf16.gmra.mxu0 %v261
    %v497 = vpop.f32.mrf.mxu0
    %v498 = vadd.f32 %v149, %v497
    %v499 = vpop.f32.mrf.mxu0
    %v500 = vpop.f32.mrf.mxu0
    %v501 = vadd.f32 %v149, %v500
    %v502 = vpop.f32.mrf.mxu0
    %503 = vmatprep.mubr.bf16.mxu0 %v264
    %504 = vmatmul.mubr.bf16.gmra.mxu0 %v263
    %v505 = vpop.f32.mrf.mxu0
    %v506 = vadd.f32 %v149, %v505
    %v507 = vpop.f32.mrf.mxu0
    %v508 = vpop.f32.mrf.mxu0
    %v509 = vadd.f32 %v149, %v508
    %v510 = vpop.f32.mrf.mxu0
    %511 = vmatprep.mubr.bf16.mxu0 %v266
    %512 = vmatmul.mubr.bf16.gmra.mxu0 %v265
    %v513 = vpop.f32.mrf.mxu0
    %v514 = vadd.f32 %v149, %v513
    %v515 = vpop.f32.mrf.mxu0
    %v516 = vpop.f32.mrf.mxu0
    %v517 = vadd.f32 %v149, %v516
    %v518 = vpop.f32.mrf.mxu0
    %519 = vmatprep.mubr.bf16.mxu0 %v268
    %520 = vmatmul.mubr.bf16.gmra.mxu0 %v267
    %v521 = vpop.f32.mrf.mxu0
    %v522 = vadd.f32 %v149, %v521
    %v523 = vpop.f32.mrf.mxu0
    %v524 = vpop.f32.mrf.mxu0
    %v525 = vadd.f32 %v149, %v524
    %v526 = vpop.f32.mrf.mxu0
    %527 = vmatprep.mubr.bf16.mxu0 %v270
    %528 = vmatmul.mubr.bf16.gmra.mxu0 %v269
    %v529 = vpop.f32.mrf.mxu0
    %v530 = vadd.f32 %v149, %v529
    %v531 = vpop.f32.mrf.mxu0
    %v532 = vpop.f32.mrf.mxu0
    %v533 = vadd.f32 %v149, %v532
    %v534 = vpop.f32.mrf.mxu0
    %535 = vmatprep.mubr.bf16.mxu0 %v272
    %536 = vmatmul.mubr.bf16.gmra.mxu0 %v271
    %v537 = vpop.f32.mrf.mxu0
    %v538 = vadd.f32 %v149, %v537
    %v539 = vpop.f32.mrf.mxu0
    %v540 = vpop.f32.mrf.mxu0
    %v541 = vadd.f32 %v149, %v540
    %v542 = vpop.f32.mrf.mxu0
    %543 = vmatprep.mubr.bf16.mxu0 %v274
    %544 = vmatmul.mubr.bf16.gmra.mxu0 %v273
    %v545 = vpop.f32.mrf.mxu0
    %v546 = vadd.f32 %v149, %v545
    %v547 = vpop.f32.mrf.mxu0
    %v548 = vpop.f32.mrf.mxu0
    %v549 = vadd.f32 %v149, %v548
    %v550 = vpop.f32.mrf.mxu0
    %551 = vmatprep.mubr.bf16.mxu0 %v276
    %552 = vmatmul.mubr.bf16.gmra.mxu0 %v275
    %v553 = vpop.f32.mrf.mxu0
    %v554 = vadd.f32 %v149, %v553
    %v555 = vpop.f32.mrf.mxu0
    %v556 = vpop.f32.mrf.mxu0
    %v557 = vadd.f32 %v149, %v556
    %v558 = vpop.f32.mrf.mxu0
    %559 = vmatprep.mubr.bf16.mxu0 %v278
    %560 = vmatmul.mubr.bf16.gmra.mxu0 %v277
    %v561 = vpop.f32.mrf.mxu0
    %v562 = vadd.f32 %v149, %v561
    %v563 = vpop.f32.mrf.mxu0
    %v564 = vpop.f32.mrf.mxu0
    %v565 = vadd.f32 %v149, %v564
    %v566 = vpop.f32.mrf.mxu0
    %567 = vdwg.mxu0
    %v568 = vmax.f32 %v442, 0.0
    %v569 = vmax.f32 %v445, 0.0
    %v570 = vmax.f32 %v450, 0.0
    %v571 = vmax.f32 %v453, 0.0
    %v572 = vmax.f32 %v458, 0.0
    %v573 = vmax.f32 %v461, 0.0
    %v574 = vmax.f32 %v466, 0.0
    %v575 = vmax.f32 %v469, 0.0
    %v576 = vmax.f32 %v474, 0.0
    %v577 = vmax.f32 %v477, 0.0
    %v578 = vmax.f32 %v482, 0.0
    %v579 = vmax.f32 %v485, 0.0
    %v580 = vmax.f32 %v490, 0.0
    %v581 = vmax.f32 %v493, 0.0
    %v582 = vmax.f32 %v498, 0.0
    %v583 = vmax.f32 %v501, 0.0
    %v584 = vmax.f32 %v506, 0.0
    %v585 = vmax.f32 %v509, 0.0
    %v586 = vmax.f32 %v514, 0.0
    %v587 = vmax.f32 %v517, 0.0
    %v588 = vmax.f32 %v522, 0.0
    %v589 = vmax.f32 %v525, 0.0
    %v590 = vmax.f32 %v530, 0.0
    %v591 = vmax.f32 %v533, 0.0
    %v592 = vmax.f32 %v538, 0.0
    %v593 = vmax.f32 %v541, 0.0
    %v594 = vmax.f32 %v546, 0.0
    %v595 = vmax.f32 %v549, 0.0
    %v596 = vmax.f32 %v554, 0.0
    %v597 = vmax.f32 %v557, 0.0
    %v598 = vmax.f32 %v562, 0.0
    %v599 = vmax.f32 %v565, 0.0
    %v600 = vpack.c.bf16 %v569, %v568
    %v601 = vpack.c.bf16 %v571, %v570
    %v602 = vpack.c.bf16 %v573, %v572
    %v603 = vpack.c.bf16 %v575, %v574
    %v604 = vpack.c.bf16 %v577, %v576
    %v605 = vpack.c.bf16 %v579, %v578
    %v606 = vpack.c.bf16 %v581, %v580
    %v607 = vpack.c.bf16 %v583, %v582
    %v608 = vpack.c.bf16 %v585, %v584
    %v609 = vpack.c.bf16 %v587, %v586
    %v610 = vpack.c.bf16 %v589, %v588
    %v611 = vpack.c.bf16 %v591, %v590
    %v612 = vpack.c.bf16 %v593, %v592
    %v613 = vpack.c.bf16 %v595, %v594
    %v614 = vpack.c.bf16 %v597, %v596
    %v615 = vpack.c.bf16 %v599, %v598
    %v616 = vld [vmem:[#allocation8] sm:$0xf]
    %v617 = vld [vmem:[#allocation8 + $0x4] sm:$0xf]
    %v618 = vld [vmem:[#allocation8 + $0x8] sm:$0xf]
    %v619 = vld [vmem:[#allocation8 + $0xc] sm:$0xf]
    %v620 = vld [vmem:[#allocation8 + $0x10] sm:$0xf]
    %v621 = vld [vmem:[#allocation8 + $0x14] sm:$0xf]
    %v622 = vld [vmem:[#allocation8 + $0x18] sm:$0xf]
    %v623 = vld [vmem:[#allocation8 + $0x1c] sm:$0xf]
    %v624 = vld [vmem:[#allocation8 + $0x20] sm:$0xf]
    %v625 = vld [vmem:[#allocation8 + $0x24] sm:$0xf]
    %v626 = vld [vmem:[#allocation8 + $0x28] sm:$0xf]
    %v627 = vld [vmem:[#allocation8 + $0x2c] sm:$0xf]
    %v628 = vld [vmem:[#allocation8 + $0x30] sm:$0xf]
    %v629 = vld [vmem:[#allocation8 + $0x34] sm:$0xf]
    %v630 = vld [vmem:[#allocation8 + $0x38] sm:$0xf]
    %v631 = vld [vmem:[#allocation8 + $0x3c] sm:$0xf]
    %v648 = vunpack.c.l.b16 %v616
    %v649 = vunpack.c.l.b16 %v617
    %v650 = vunpack.c.l.b16 %v618
    %v651 = vunpack.c.l.b16 %v619
    %v652 = vunpack.c.l.b16 %v620
    %v653 = vunpack.c.l.b16 %v621
    %v654 = vunpack.c.l.b16 %v622
    %v655 = vunpack.c.l.b16 %v623
    %v656 = vunpack.c.l.b16 %v624
    %v657 = vunpack.c.l.b16 %v625
    %v658 = vunpack.c.l.b16 %v626
    %v659 = vunpack.c.l.b16 %v627
    %v660 = vunpack.c.l.b16 %v628
    %v661 = vunpack.c.l.b16 %v629
    %v662 = vunpack.c.l.b16 %v630
    %v663 = vunpack.c.l.b16 %v631
    %v664 = vpack.c.b16 %v649, %v648
    %v665 = vpack.c.b16 %v651, %v650
    %v666 = vpack.c.b16 %v653, %v652
    %v667 = vpack.c.b16 %v655, %v654
    %v668 = vpack.c.b16 %v657, %v656
    %v669 = vpack.c.b16 %v659, %v658
    %v670 = vpack.c.b16 %v661, %v660
    %v671 = vpack.c.b16 %v663, %v662
    %680 = vmatprep.subr.bf16.mxu0 0
    %681 = vmatpush1.bf16.msra.mxu0 %v671
    %682 = vmatprep.subr.bf16.mxu0 0
    %683 = vmatpush1.bf16.msra.mxu0 %v670
    %684 = vmatprep.subr.bf16.mxu0 0
    %685 = vmatpush1.bf16.msra.mxu0 %v669
    %686 = vmatprep.subr.bf16.mxu0 0
    %687 = vmatpush1.bf16.msra.mxu0 %v668
    %688 = vmatprep.subr.bf16.mxu0 0
    %689 = vmatpush1.bf16.msra.mxu0 %v667
    %690 = vmatprep.subr.bf16.mxu0 0
    %691 = vmatpush1.bf16.msra.mxu0 %v666
    %692 = vmatprep.subr.bf16.mxu0 0
    %693 = vmatpush1.bf16.msra.mxu0 %v665
    %694 = vmatprep.subr.bf16.mxu0 0
    %695 = vmatpush1.bf16.msra.mxu0 %v664
    %696 = vmatprep.subr.bf16.mxu0 0
    %697 = vmatpush2.bf16.msra.mxu0 0
    %698 = vmatprep.subr.bf16.mxu0 0
    %699 = vmatpush2.bf16.msra.mxu0 0
    %700 = vmatprep.subr.bf16.mxu0 0
    %701 = vmatpush2.bf16.msra.mxu0 0
    %702 = vmatprep.subr.bf16.mxu0 0
    %703 = vmatpush2.bf16.msra.mxu0 0
    %704 = vmatprep.subr.bf16.mxu0 0
    %705 = vmatpush2.bf16.msra.mxu0 0
    %706 = vmatprep.subr.bf16.mxu0 0
    %707 = vmatpush2.bf16.msra.mxu0 0
    %708 = vmatprep.subr.bf16.mxu0 0
    %709 = vmatpush2.bf16.msra.mxu0 0
    %710 = vmatprep.subr.bf16.mxu0 0
    %711 = vmatpush2.bf16.msra.mxu0 0
    %712 = vmatprep.mubr.bf16.mxu0 0
    %713 = vmatmul.mubr.bf16.gmra.mxu0 %v600
    %v714 = vpop.f32.mrf.mxu0
    %v715 = vadd.f32 0.0, %v714
    %v716 = vpop.f32.mrf.mxu0
    %v717 = vpop.f32.mrf.mxu0
    %v718 = vadd.f32 0.0, %v717
    %v719 = vpop.f32.mrf.mxu0
    %720 = vmatprep.mubr.bf16.mxu0 0
    %721 = vmatmul.mubr.bf16.gmra.mxu0 %v601
    %v722 = vpop.f32.mrf.mxu0
    %v723 = vadd.f32 0.0, %v722
    %v724 = vpop.f32.mrf.mxu0
    %v725 = vpop.f32.mrf.mxu0
    %v726 = vadd.f32 0.0, %v725
    %v727 = vpop.f32.mrf.mxu0
    %728 = vmatprep.mubr.bf16.mxu0 0
    %729 = vmatmul.mubr.bf16.gmra.mxu0 %v602
    %v730 = vpop.f32.mrf.mxu0
    %v731 = vadd.f32 0.0, %v730
    %v732 = vpop.f32.mrf.mxu0
    %v733 = vpop.f32.mrf.mxu0
    %v734 = vadd.f32 0.0, %v733
    %v735 = vpop.f32.mrf.mxu0
    %736 = vmatprep.mubr.bf16.mxu0 0
    %737 = vmatmul.mubr.bf16.gmra.mxu0 %v603
    %v738 = vpop.f32.mrf.mxu0
    %v739 = vadd.f32 0.0, %v738
    %v740 = vpop.f32.mrf.mxu0
    %v741 = vpop.f32.mrf.mxu0
    %v742 = vadd.f32 0.0, %v741
    %v743 = vpop.f32.mrf.mxu0
    %744 = vmatprep.mubr.bf16.mxu0 0
    %745 = vmatmul.mubr.bf16.gmra.mxu0 %v604
    %v746 = vpop.f32.mrf.mxu0
    %v747 = vadd.f32 0.0, %v746
    %v748 = vpop.f32.mrf.mxu0
    %v749 = vpop.f32.mrf.mxu0
    %v750 = vadd.f32 0.0, %v749
    %v751 = vpop.f32.mrf.mxu0
    %752 = vmatprep.mubr.bf16.mxu0 0
    %753 = vmatmul.mubr.bf16.gmra.mxu0 %v605
    %v754 = vpop.f32.mrf.mxu0
    %v755 = vadd.f32 0.0, %v754
    %v756 = vpop.f32.mrf.mxu0
    %v757 = vpop.f32.mrf.mxu0
    %v758 = vadd.f32 0.0, %v757
    %v759 = vpop.f32.mrf.mxu0
    %760 = vmatprep.mubr.bf16.mxu0 0
    %761 = vmatmul.mubr.bf16.gmra.mxu0 %v606
    %v762 = vpop.f32.mrf.mxu0
    %v763 = vadd.f32 0.0, %v762
    %v764 = vpop.f32.mrf.mxu0
    %v765 = vpop.f32.mrf.mxu0
    %v766 = vadd.f32 0.0, %v765
    %v767 = vpop.f32.mrf.mxu0
    %768 = vmatprep.mubr.bf16.mxu0 0
    %769 = vmatmul.mubr.bf16.gmra.mxu0 %v607
    %v770 = vpop.f32.mrf.mxu0
    %v771 = vadd.f32 0.0, %v770
    %v772 = vpop.f32.mrf.mxu0
    %v773 = vpop.f32.mrf.mxu0
    %v774 = vadd.f32 0.0, %v773
    %v775 = vpop.f32.mrf.mxu0
    %776 = vmatprep.mubr.bf16.mxu0 0
    %777 = vmatmul.mubr.bf16.gmra.mxu0 %v608
    %v778 = vpop.f32.mrf.mxu0
    %v779 = vadd.f32 0.0, %v778
    %v780 = vpop.f32.mrf.mxu0
    %v781 = vpop.f32.mrf.mxu0
    %v782 = vadd.f32 0.0, %v781
    %v783 = vpop.f32.mrf.mxu0
    %784 = vmatprep.mubr.bf16.mxu0 0
    %785 = vmatmul.mubr.bf16.gmra.mxu0 %v609
    %v786 = vpop.f32.mrf.mxu0
    %v787 = vadd.f32 0.0, %v786
    %v788 = vpop.f32.mrf.mxu0
    %v789 = vpop.f32.mrf.mxu0
    %v790 = vadd.f32 0.0, %v789
    %v791 = vpop.f32.mrf.mxu0
    %792 = vmatprep.mubr.bf16.mxu0 0
    %793 = vmatmul.mubr.bf16.gmra.mxu0 %v610
    %v794 = vpop.f32.mrf.mxu0
    %v795 = vadd.f32 0.0, %v794
    %v796 = vpop.f32.mrf.mxu0
    %v797 = vpop.f32.mrf.mxu0
    %v798 = vadd.f32 0.0, %v797
    %v799 = vpop.f32.mrf.mxu0
    %800 = vmatprep.mubr.bf16.mxu0 0
    %801 = vmatmul.mubr.bf16.gmra.mxu0 %v611
    %v802 = vpop.f32.mrf.mxu0
    %v803 = vadd.f32 0.0, %v802
    %v804 = vpop.f32.mrf.mxu0
    %v805 = vpop.f32.mrf.mxu0
    %v806 = vadd.f32 0.0, %v805
    %v807 = vpop.f32.mrf.mxu0
    %808 = vmatprep.mubr.bf16.mxu0 0
    %809 = vmatmul.mubr.bf16.gmra.mxu0 %v612
    %v810 = vpop.f32.mrf.mxu0
    %v811 = vadd.f32 0.0, %v810
    %v812 = vpop.f32.mrf.mxu0
    %v813 = vpop.f32.mrf.mxu0
    %v814 = vadd.f32 0.0, %v813
    %v815 = vpop.f32.mrf.mxu0
    %816 = vmatprep.mubr.bf16.mxu0 0
    %817 = vmatmul.mubr.bf16.gmra.mxu0 %v613
    %v818 = vpop.f32.mrf.mxu0
    %v819 = vadd.f32 0.0, %v818
    %v820 = vpop.f32.mrf.mxu0
    %v821 = vpop.f32.mrf.mxu0
    %v822 = vadd.f32 0.0, %v821
    %v823 = vpop.f32.mrf.mxu0
    %824 = vmatprep.mubr.bf16.mxu0 0
    %825 = vmatmul.mubr.bf16.gmra.mxu0 %v614
    %v826 = vpop.f32.mrf.mxu0
    %v827 = vadd.f32 0.0, %v826
    %v828 = vpop.f32.mrf.mxu0
    %v829 = vpop.f32.mrf.mxu0
    %v830 = vadd.f32 0.0, %v829
    %v831 = vpop.f32.mrf.mxu0
    %832 = vmatprep.mubr.bf16.mxu0 0
    %833 = vmatmul.mubr.bf16.gmra.mxu0 %v615
    %v834 = vpop.f32.mrf.mxu0
    %v835 = vadd.f32 0.0, %v834
    %v836 = vpop.f32.mrf.mxu0
    %v837 = vpop.f32.mrf.mxu0
    %v838 = vadd.f32 0.0, %v837
    %v839 = vpop.f32.mrf.mxu0
    %840 = vdwg.mxu0
    %v841 = vpack.c.bf16 %v718, %v715
    %v842 = vpack.c.bf16 %v726, %v723
    %v843 = vpack.c.bf16 %v734, %v731
    %v844 = vpack.c.bf16 %v742, %v739
    %v845 = vpack.c.bf16 %v750, %v747
    %v846 = vpack.c.bf16 %v758, %v755
    %v847 = vpack.c.bf16 %v766, %v763
    %v848 = vpack.c.bf16 %v774, %v771
    %v849 = vpack.c.bf16 %v782, %v779
    %v850 = vpack.c.bf16 %v790, %v787
    %v851 = vpack.c.bf16 %v798, %v795
    %v852 = vpack.c.bf16 %v806, %v803
    %v853 = vpack.c.bf16 %v814, %v811
    %v854 = vpack.c.bf16 %v822, %v819
    %v855 = vpack.c.bf16 %v830, %v827
    %v856 = vpack.c.bf16 %v838, %v835
    %v857 = vld [vmem:[#allocation5] sm:$0xff]
    %v858 = vld [vmem:[#allocation5 + $0x8] sm:$0xff]
    %v859 = vld [vmem:[#allocation5 + $0x10] sm:$0xff]
    %v860 = vld [vmem:[#allocation5 + $0x18] sm:$0xff]
    %v861 = vld [vmem:[#allocation5 + $0x20] sm:$0xff]
    %v862 = vld [vmem:[#allocation5 + $0x28] sm:$0xff]
    %v863 = vld [vmem:[#allocation5 + $0x30] sm:$0xff]
    %v864 = vld [vmem:[#allocation5 + $0x38] sm:$0xff]
    %v865 = vld [vmem:[#allocation5 + $0x40] sm:$0xff]
    %v866 = vld [vmem:[#allocation5 + $0x48] sm:$0xff]
    %v867 = vld [vmem:[#allocation5 + $0x50] sm:$0xff]
    %v868 = vld [vmem:[#allocation5 + $0x58] sm:$0xff]
    %v869 = vld [vmem:[#allocation5 + $0x60] sm:$0xff]
    %v870 = vld [vmem:[#allocation5 + $0x68] sm:$0xff]
    %v871 = vld [vmem:[#allocation5 + $0x70] sm:$0xff]
    %v872 = vld [vmem:[#allocation5 + $0x78] sm:$0xff]
    %v873 = vld [vmem:[#allocation5 + $0x80] sm:$0xff]
    %v874 = vld [vmem:[#allocation5 + $0x88] sm:$0xff]
    %v875 = vld [vmem:[#allocation5 + $0x90] sm:$0xff]
    %v876 = vld [vmem:[#allocation5 + $0x98] sm:$0xff]
    %v877 = vld [vmem:[#allocation5 + $0xa0] sm:$0xff]
    %v878 = vld [vmem:[#allocation5 + $0xa8] sm:$0xff]
    %v879 = vld [vmem:[#allocation5 + $0xb0] sm:$0xff]
    %v880 = vld [vmem:[#allocation5 + $0xb8] sm:$0xff]
    %v881 = vld [vmem:[#allocation5 + $0xc0] sm:$0xff]
    %v882 = vld [vmem:[#allocation5 + $0xc8] sm:$0xff]
    %v883 = vld [vmem:[#allocation5 + $0xd0] sm:$0xff]
    %v884 = vld [vmem:[#allocation5 + $0xd8] sm:$0xff]
    %v885 = vld [vmem:[#allocation5 + $0xe0] sm:$0xff]
    %v886 = vld [vmem:[#allocation5 + $0xe8] sm:$0xff]
    %v887 = vld [vmem:[#allocation5 + $0xf0] sm:$0xff]
    %v888 = vld [vmem:[#allocation5 + $0xf8] sm:$0xff]
    %v889 = vld [vmem:[%s5] sm:$0x1]
    %v891 = vlaneseq
    %v892 = vshrl.u32 %v891, 7
    %v893 = vsub.s32 0, %v892
    %v894 = vrot.slane %v889, %v893
    %v928 = vunpack.c.l.b16 %v857
    %v929 = vunpack.c.h.b16 %v857
    %v930 = vunpack.c.l.b16 %v858
    %v931 = vunpack.c.h.b16 %v858
    %v932 = vunpack.c.l.b16 %v859
    %v933 = vunpack.c.h.b16 %v859
    %v934 = vunpack.c.l.b16 %v860
    %v935 = vunpack.c.h.b16 %v860
    %v936 = vunpack.c.l.b16 %v861
    %v937 = vunpack.c.h.b16 %v861
    %v938 = vunpack.c.l.b16 %v862
    %v939 = vunpack.c.h.b16 %v862
    %v940 = vunpack.c.l.b16 %v863
    %v941 = vunpack.c.h.b16 %v863
    %v942 = vunpack.c.l.b16 %v864
    %v943 = vunpack.c.h.b16 %v864
    %v944 = vunpack.c.l.b16 %v865
    %v945 = vunpack.c.h.b16 %v865
    %v946 = vunpack.c.l.b16 %v866
    %v947 = vunpack.c.h.b16 %v866
    %v948 = vunpack.c.l.b16 %v867
    %v949 = vunpack.c.h.b16 %v867
    %v950 = vunpack.c.l.b16 %v868
    %v951 = vunpack.c.h.b16 %v868
    %v952 = vunpack.c.l.b16 %v869
    %v953 = vunpack.c.h.b16 %v869
    %v954 = vunpack.c.l.b16 %v870
    %v955 = vunpack.c.h.b16 %v870
    %v956 = vunpack.c.l.b16 %v871
    %v957 = vunpack.c.h.b16 %v871
    %v958 = vunpack.c.l.b16 %v872
    %v959 = vunpack.c.h.b16 %v872
    %v960 = vunpack.c.l.b16 %v873
    %v961 = vunpack.c.h.b16 %v873
    %v962 = vunpack.c.l.b16 %v874
    %v963 = vunpack.c.h.b16 %v874
    %v964 = vunpack.c.l.b16 %v875
    %v965 = vunpack.c.h.b16 %v875
    %v966 = vunpack.c.l.b16 %v876
    %v967 = vunpack.c.h.b16 %v876
    %v968 = vunpack.c.l.b16 %v877
    %v969 = vunpack.c.h.b16 %v877
    %v970 = vunpack.c.l.b16 %v878
    %v971 = vunpack.c.h.b16 %v878
    %v972 = vunpack.c.l.b16 %v879
    %v973 = vunpack.c.h.b16 %v879
    %v974 = vunpack.c.l.b16 %v880
    %v975 = vunpack.c.h.b16 %v880
    %v976 = vunpack.c.l.b16 %v881
    %v977 = vunpack.c.h.b16 %v881
    %v978 = vunpack.c.l.b16 %v882
    %v979 = vunpack.c.h.b16 %v882
    %v980 = vunpack.c.l.b16 %v883
    %v981 = vunpack.c.h.b16 %v883
    %v982 = vunpack.c.l.b16 %v884
    %v983 = vunpack.c.h.b16 %v884
    %v984 = vunpack.c.l.b16 %v885
    %v985 = vunpack.c.h.b16 %v885
    %v986 = vunpack.c.l.b16 %v886
    %v987 = vunpack.c.h.b16 %v886
    %v988 = vunpack.c.l.b16 %v887
    %v989 = vunpack.c.h.b16 %v887
    %v990 = vunpack.c.l.b16 %v888
    %v991 = vunpack.c.h.b16 %v888
    %v992 = vpack.c.b16 %v930, %v928
    %v993 = vpack.c.b16 %v931, %v929
    %v994 = vpack.c.b16 %v934, %v932
    %v995 = vpack.c.b16 %v935, %v933
    %v996 = vpack.c.b16 %v938, %v936
    %v997 = vpack.c.b16 %v939, %v937
    %v998 = vpack.c.b16 %v942, %v940
    %v999 = vpack.c.b16 %v943, %v941
    %v1000 = vpack.c.b16 %v946, %v944
    %v1001 = vpack.c.b16 %v947, %v945
    %v1002 = vpack.c.b16 %v950, %v948
    %v1003 = vpack.c.b16 %v951, %v949
    %v1004 = vpack.c.b16 %v954, %v952
    %v1005 = vpack.c.b16 %v955, %v953
    %v1006 = vpack.c.b16 %v958, %v956
    %v1007 = vpack.c.b16 %v959, %v957
    %v1008 = vpack.c.b16 %v962, %v960
    %v1009 = vpack.c.b16 %v963, %v961
    %v1010 = vpack.c.b16 %v966, %v964
    %v1011 = vpack.c.b16 %v967, %v965
    %v1012 = vpack.c.b16 %v970, %v968
    %v1013 = vpack.c.b16 %v971, %v969
    %v1014 = vpack.c.b16 %v974, %v972
    %v1015 = vpack.c.b16 %v975, %v973
    %v1016 = vpack.c.b16 %v978, %v976
    %v1017 = vpack.c.b16 %v979, %v977
    %v1018 = vpack.c.b16 %v982, %v980
    %v1019 = vpack.c.b16 %v983, %v981
    %v1020 = vpack.c.b16 %v986, %v984
    %v1021 = vpack.c.b16 %v987, %v985
    %v1022 = vpack.c.b16 %v990, %v988
    %v1023 = vpack.c.b16 %v991, %v989
    %1056 = vmatprep.subr.bf16.mxu0 0
    %1057 = vmatpush1.bf16.msra.mxu0 %v848
    %1058 = vmatprep.subr.bf16.mxu0 0
    %1059 = vmatpush1.bf16.msra.mxu0 %v847
    %1060 = vmatprep.subr.bf16.mxu0 0
    %1061 = vmatpush1.bf16.msra.mxu0 %v846
    %1062 = vmatprep.subr.bf16.mxu0 0
    %1063 = vmatpush1.bf16.msra.mxu0 %v845
    %1064 = vmatprep.subr.bf16.mxu0 0
    %1065 = vmatpush1.bf16.msra.mxu0 %v844
    %1066 = vmatprep.subr.bf16.mxu0 0
    %1067 = vmatpush1.bf16.msra.mxu0 %v843
    %1068 = vmatprep.subr.bf16.mxu0 0
    %1069 = vmatpush1.bf16.msra.mxu0 %v842
    %1070 = vmatprep.subr.bf16.mxu0 0
    %1071 = vmatpush1.bf16.msra.mxu0 %v841
    %1072 = vmatprep.subr.bf16.mxu0 0
    %1073 = vmatpush2.bf16.msra.mxu0 %v856
    %1074 = vmatprep.subr.bf16.mxu0 0
    %1075 = vmatpush2.bf16.msra.mxu0 %v855
    %1076 = vmatprep.subr.bf16.mxu0 0
    %1077 = vmatpush2.bf16.msra.mxu0 %v854
    %1078 = vmatprep.subr.bf16.mxu0 0
    %1079 = vmatpush2.bf16.msra.mxu0 %v853
    %1080 = vmatprep.subr.bf16.mxu0 0
    %1081 = vmatpush2.bf16.msra.mxu0 %v852
    %1082 = vmatprep.subr.bf16.mxu0 0
    %1083 = vmatpush2.bf16.msra.mxu0 %v851
    %1084 = vmatprep.subr.bf16.mxu0 0
    %1085 = vmatpush2.bf16.msra.mxu0 %v850
    %1086 = vmatprep.subr.bf16.mxu0 0
    %1087 = vmatpush2.bf16.msra.mxu0 %v849
    %1088 = vmatprep.mubr.bf16.mxu0 %v993
    %1089 = vmatmul.mubr.bf16.gmra.mxu0 %v992
    %v1090 = vpop.f32.mrf.mxu0
    %v1091 = vadd.f32 %v894, %v1090
    %v1092 = vpop.f32.mrf.mxu0
    %v1093 = vpop.f32.mrf.mxu0
    %v1094 = vadd.f32 %v894, %v1093
    %v1095 = vpop.f32.mrf.mxu0
    %1096 = vmatprep.mubr.bf16.mxu0 %v995
    %1097 = vmatmul.mubr.bf16.gmra.mxu0 %v994
    %v1098 = vpop.f32.mrf.mxu0
    %v1099 = vadd.f32 %v894, %v1098
    %v1100 = vpop.f32.mrf.mxu0
    %v1101 = vpop.f32.mrf.mxu0
    %v1102 = vadd.f32 %v894, %v1101
    %v1103 = vpop.f32.mrf.mxu0
    %1104 = vmatprep.mubr.bf16.mxu0 %v997
    %1105 = vmatmul.mubr.bf16.gmra.mxu0 %v996
    %v1106 = vpop.f32.mrf.mxu0
    %v1107 = vadd.f32 %v894, %v1106
    %v1108 = vpop.f32.mrf.mxu0
    %v1109 = vpop.f32.mrf.mxu0
    %v1110 = vadd.f32 %v894, %v1109
    %v1111 = vpop.f32.mrf.mxu0
    %1112 = vmatprep.mubr.bf16.mxu0 %v999
    %1113 = vmatmul.mubr.bf16.gmra.mxu0 %v998
    %v1114 = vpop.f32.mrf.mxu0
    %v1115 = vadd.f32 %v894, %v1114
    %v1116 = vpop.f32.mrf.mxu0
    %v1117 = vpop.f32.mrf.mxu0
    %v1118 = vadd.f32 %v894, %v1117
    %v1119 = vpop.f32.mrf.mxu0
    %1120 = vmatprep.mubr.bf16.mxu0 %v1001
    %1121 = vmatmul.mubr.bf16.gmra.mxu0 %v1000
    %v1122 = vpop.f32.mrf.mxu0
    %v1123 = vadd.f32 %v894, %v1122
    %v1124 = vpop.f32.mrf.mxu0
    %v1125 = vpop.f32.mrf.mxu0
    %v1126 = vadd.f32 %v894, %v1125
    %v1127 = vpop.f32.mrf.mxu0
    %1128 = vmatprep.mubr.bf16.mxu0 %v1003
    %1129 = vmatmul.mubr.bf16.gmra.mxu0 %v1002
    %v1130 = vpop.f32.mrf.mxu0
    %v1131 = vadd.f32 %v894, %v1130
    %v1132 = vpop.f32.mrf.mxu0
    %v1133 = vpop.f32.mrf.mxu0
    %v1134 = vadd.f32 %v894, %v1133
    %v1135 = vpop.f32.mrf.mxu0
    %1136 = vmatprep.mubr.bf16.mxu0 %v1005
    %1137 = vmatmul.mubr.bf16.gmra.mxu0 %v1004
    %v1138 = vpop.f32.mrf.mxu0
    %v1139 = vadd.f32 %v894, %v1138
    %v1140 = vpop.f32.mrf.mxu0
    %v1141 = vpop.f32.mrf.mxu0
    %v1142 = vadd.f32 %v894, %v1141
    %v1143 = vpop.f32.mrf.mxu0
    %1144 = vmatprep.mubr.bf16.mxu0 %v1007
    %1145 = vmatmul.mubr.bf16.gmra.mxu0 %v1006
    %v1146 = vpop.f32.mrf.mxu0
    %v1147 = vadd.f32 %v894, %v1146
    %v1148 = vpop.f32.mrf.mxu0
    %v1149 = vpop.f32.mrf.mxu0
    %v1150 = vadd.f32 %v894, %v1149
    %v1151 = vpop.f32.mrf.mxu0
    %1152 = vmatprep.mubr.bf16.mxu0 %v1009
    %1153 = vmatmul.mubr.bf16.gmra.mxu0 %v1008
    %v1154 = vpop.f32.mrf.mxu0
    %v1155 = vadd.f32 %v894, %v1154
    %v1156 = vpop.f32.mrf.mxu0
    %v1157 = vpop.f32.mrf.mxu0
    %v1158 = vadd.f32 %v894, %v1157
    %v1159 = vpop.f32.mrf.mxu0
    %1160 = vmatprep.mubr.bf16.mxu0 %v1011
    %1161 = vmatmul.mubr.bf16.gmra.mxu0 %v1010
    %v1162 = vpop.f32.mrf.mxu0
    %v1163 = vadd.f32 %v894, %v1162
    %v1164 = vpop.f32.mrf.mxu0
    %v1165 = vpop.f32.mrf.mxu0
    %v1166 = vadd.f32 %v894, %v1165
    %v1167 = vpop.f32.mrf.mxu0
    %1168 = vmatprep.mubr.bf16.mxu0 %v1013
    %1169 = vmatmul.mubr.bf16.gmra.mxu0 %v1012
    %v1170 = vpop.f32.mrf.mxu0
    %v1171 = vadd.f32 %v894, %v1170
    %v1172 = vpop.f32.mrf.mxu0
    %v1173 = vpop.f32.mrf.mxu0
    %v1174 = vadd.f32 %v894, %v1173
    %v1175 = vpop.f32.mrf.mxu0
    %1176 = vmatprep.mubr.bf16.mxu0 %v1015
    %1177 = vmatmul.mubr.bf16.gmra.mxu0 %v1014
    %v1178 = vpop.f32.mrf.mxu0
    %v1179 = vadd.f32 %v894, %v1178
    %v1180 = vpop.f32.mrf.mxu0
    %v1181 = vpop.f32.mrf.mxu0
    %v1182 = vadd.f32 %v894, %v1181
    %v1183 = vpop.f32.mrf.mxu0
    %1184 = vmatprep.mubr.bf16.mxu0 %v1017
    %1185 = vmatmul.mubr.bf16.gmra.mxu0 %v1016
    %v1186 = vpop.f32.mrf.mxu0
    %v1187 = vadd.f32 %v894, %v1186
    %v1188 = vpop.f32.mrf.mxu0
    %v1189 = vpop.f32.mrf.mxu0
    %v1190 = vadd.f32 %v894, %v1189
    %v1191 = vpop.f32.mrf.mxu0
    %1192 = vmatprep.mubr.bf16.mxu0 %v1019
    %1193 = vmatmul.mubr.bf16.gmra.mxu0 %v1018
    %v1194 = vpop.f32.mrf.mxu0
    %v1195 = vadd.f32 %v894, %v1194
    %v1196 = vpop.f32.mrf.mxu0
    %v1197 = vpop.f32.mrf.mxu0
    %v1198 = vadd.f32 %v894, %v1197
    %v1199 = vpop.f32.mrf.mxu0
    %1200 = vmatprep.mubr.bf16.mxu0 %v1021
    %1201 = vmatmul.mubr.bf16.gmra.mxu0 %v1020
    %v1202 = vpop.f32.mrf.mxu0
    %v1203 = vadd.f32 %v894, %v1202
    %v1204 = vpop.f32.mrf.mxu0
    %v1205 = vpop.f32.mrf.mxu0
    %v1206 = vadd.f32 %v894, %v1205
    %v1207 = vpop.f32.mrf.mxu0
    %1208 = vmatprep.mubr.bf16.mxu0 %v1023
    %1209 = vmatmul.mubr.bf16.gmra.mxu0 %v1022
    %v1210 = vpop.f32.mrf.mxu0
    %v1211 = vadd.f32 %v894, %v1210
    %v1212 = vpop.f32.mrf.mxu0
    %v1213 = vpop.f32.mrf.mxu0
    %v1214 = vadd.f32 %v894, %v1213
    %v1215 = vpop.f32.mrf.mxu0
    %1216 = vdwg.mxu0
    %1217 = vst [vmem:[#allocation10] sm:$0xff] %v1091
    %1218 = vst [vmem:[#allocation10 + $0x8] sm:$0xff] %v1094
    %1219 = vst [vmem:[#allocation10 + $0x10] sm:$0xff] %v1099
    %1220 = vst [vmem:[#allocation10 + $0x18] sm:$0xff] %v1102
    %1221 = vst [vmem:[#allocation10 + $0x20] sm:$0xff] %v1107
    %1222 = vst [vmem:[#allocation10 + $0x28] sm:$0xff] %v1110
    %1223 = vst [vmem:[#allocation10 + $0x30] sm:$0xff] %v1115
    %1224 = vst [vmem:[#allocation10 + $0x38] sm:$0xff] %v1118
    %1225 = vst [vmem:[#allocation10 + $0x40] sm:$0xff] %v1123
    %1226 = vst [vmem:[#allocation10 + $0x48] sm:$0xff] %v1126
    %1227 = vst [vmem:[#allocation10 + $0x50] sm:$0xff] %v1131
    %1228 = vst [vmem:[#allocation10 + $0x58] sm:$0xff] %v1134
    %1229 = vst [vmem:[#allocation10 + $0x60] sm:$0xff] %v1139
    %1230 = vst [vmem:[#allocation10 + $0x68] sm:$0xff] %v1142
    %1231 = vst [vmem:[#allocation10 + $0x70] sm:$0xff] %v1147
    %1232 = vst [vmem:[#allocation10 + $0x78] sm:$0xff] %v1150
    %1233 = vst [vmem:[#allocation10 + $0x80] sm:$0xff] %v1155
    %1234 = vst [vmem:[#allocation10 + $0x88] sm:$0xff] %v1158
    %1235 = vst [vmem:[#allocation10 + $0x90] sm:$0xff] %v1163
    %1236 = vst [vmem:[#allocation10 + $0x98] sm:$0xff] %v1166
    %1237 = vst [vmem:[#allocation10 + $0xa0] sm:$0xff] %v1171
    %1238 = vst [vmem:[#allocation10 + $0xa8] sm:$0xff] %v1174
    %1239 = vst [vmem:[#allocation10 + $0xb0] sm:$0xff] %v1179
    %1240 = vst [vmem:[#allocation10 + $0xb8] sm:$0xff] %v1182
    %1241 = vst [vmem:[#allocation10 + $0xc0] sm:$0xff] %v1187
    %1242 = vst [vmem:[#allocation10 + $0xc8] sm:$0xff] %v1190
    %1243 = vst [vmem:[#allocation10 + $0xd0] sm:$0xff] %v1195
    %1244 = vst [vmem:[#allocation10 + $0xd8] sm:$0xff] %v1198
    %1245 = vst [vmem:[#allocation10 + $0xe0] sm:$0xff] %v1203
    %1246 = vst [vmem:[#allocation10 + $0xe8] sm:$0xff] %v1206
    %1247 = vst [vmem:[#allocation10 + $0xf0] sm:$0xff] %v1211
    %1248 = vst [vmem:[#allocation10 + $0xf8] sm:$0xff] %v1214
    // Predicated region
    $region42: #{tpu_custom_call.1} parent=1 // pred_check
      _
    $region43: #{tpu_custom_call.1} parent=1 // pred_check_branch
      %1250 = sbr.rel (0) target = $region45
    $region44: #{tpu_custom_call.1} parent=1 // pred_region
      %s1252 = ssub.s32 4096, 4096
      %1253 = vsyncadd [#allocation4], %s1252
      %s1254 = sshll.u32 [#allocation10], 4
      %s1255 = int_to_ptr.vmem [resolvable:$true] %s1254
      %1260 = dma.vmem_to_hbm [thread:$0]  %s1255, 4096, %s6, [#allocation4], 128, 128, 8
    $region45: #{tpu_custom_call.1} parent=1 // pred_fallthru
      _
    // Predicated region
    $region46: #{tpu_custom_call.1} parent=1 // pred_check
      _
    $region47: #{tpu_custom_call.1} parent=1 // pred_check_branch
      %1262 = sbr.rel (0) target = $region49
    $region48: #{tpu_custom_call.1} parent=1 // pred_region
      %1263 = dma.done [#allocation4], 4096
    $region49: #{tpu_custom_call.1} parent=1 // pred_fallthru
      _
    %1264 = vsyncpa [#allocation3], 1
    %1265 = vsyncpa [#allocation6], 1
    %1266 = vsyncpa [#allocation9], 1
    %1267 = vsyncpa [#allocation4], 1

</llo_original>
